<compile_context>
chip_gen: v6e
topology: v6e:2x2x1
jax: 0.10.0
libtpu: 0.0.40
codegen_flags: <defaults>
</compile_context>

<pallas_src>
import functools

import jax
import jax.numpy as jnp
from jax.experimental import pallas as pl
from jax.experimental.pallas import tpu as pltpu

LANE = 128


def _round_up(x, m):
    return (x + m - 1) // m * m


def dueling_kernel(x_ref, wb_ref, bb_ref, wh_ref, bh_ref, q_ref, *, action_dim):
    # phi = relu(x @ Wb + bb)                                [TB, F_pad]
    phi = jnp.dot(x_ref[...], wb_ref[...], preferred_element_type=jnp.float32)
    phi = jnp.maximum(phi + bb_ref[...], 0.0)

    # Fused head: columns [0, A) = advantage, column A = value, rest = 0.
    head = jnp.dot(phi, wh_ref[...], preferred_element_type=jnp.float32)
    head = head + bh_ref[...]                               # [TB, OUT_PAD]

    value = head[:, action_dim:action_dim + 1]              # [TB, 1]
    # Padded columns (> A) are exactly zero, so sum(head) - value == sum(adv).
    adv_sum = jnp.sum(head, axis=1, keepdims=True) - value
    adv_mean = adv_sum * (1.0 / float(action_dim))

    # q = value + (adv - adv_mean); only columns [0, A) are meaningful,
    # the wrapper slices them out.  Full-lane store keeps vst unmasked.
    q_ref[...] = value + (head - adv_mean)


def dueling_net_policy(obs, params, *, action_dim):
    """obs: [B, C, H, W] float32. Returns {'value': q} with q: [B, action_dim]."""
    B = obs.shape[0]
    x = obs.reshape(B, -1).astype(jnp.float32)              # flatten NCHW
    in_dim = x.shape[1]

    wb, bb = params["w_body"], params["b_body"]             # [in, F], [1, F]
    wv, bv = params["w_value"], params["b_value"]           # [F, 1],  [1, 1]
    wa, ba = params["w_adv"], params["b_adv"]               # [F, A],  [1, A]
    F = wb.shape[1]

    # ---- padded / fused shapes ------------------------------------------
    in_pad = _round_up(in_dim, LANE)
    f_pad = _round_up(F, LANE)
    out_pad = _round_up(action_dim + 1, LANE)

    TB = min(256, _round_up(B, 8))                          # batch tile (rows)
    b_pad = _round_up(B, TB)

    x_p = jnp.zeros((b_pad, in_pad), jnp.float32).at[:B, :in_dim].set(x)
    wb_p = jnp.zeros((in_pad, f_pad), jnp.float32).at[:in_dim, :F].set(wb)
    bb_p = jnp.zeros((1, f_pad), jnp.float32).at[:, :F].set(bb)

    # fused head weight/bias: [advantage | value | zero padding]
    wh = jnp.concatenate([wa, wv], axis=1)                  # [F, A+1]
    bh = jnp.concatenate([ba, bv], axis=1)                  # [1, A+1]
    wh_p = jnp.zeros((f_pad, out_pad), jnp.float32).at[:F, :action_dim + 1].set(wh)
    bh_p = jnp.zeros((1, out_pad), jnp.float32).at[:, :action_dim + 1].set(bh)

    grid = (b_pad // TB,)

    flops = 2 * b_pad * in_pad * f_pad + 2 * b_pad * f_pad * out_pad
    bytes_accessed = 4 * (x_p.size + wb_p.size + bb_p.size + wh_p.size
                          + bh_p.size + b_pad * out_pad)
    cost = pl.CostEstimate(flops=flops, transcendentals=0,
                           bytes_accessed=bytes_accessed)

    q_pad = pl.pallas_call(
        functools.partial(dueling_kernel, action_dim=action_dim),
        out_shape=jax.ShapeDtypeStruct((b_pad, out_pad), jnp.float32),
        grid=grid,
        in_specs=[
            pl.BlockSpec((TB, in_pad), lambda i: (i, 0)),       # x tile
            pl.BlockSpec((in_pad, f_pad), lambda i: (0, 0)),    # w_body (resident)
            pl.BlockSpec((1, f_pad), lambda i: (0, 0)),         # b_body (resident)
            pl.BlockSpec((f_pad, out_pad), lambda i: (0, 0)),   # w_head (resident)
            pl.BlockSpec((1, out_pad), lambda i: (0, 0)),       # b_head (resident)
        ],
        out_specs=pl.BlockSpec((TB, out_pad), lambda i: (i, 0)),
        compiler_params=pltpu.CompilerParams(
            dimension_semantics=("parallel",)),
        cost_estimate=cost,
    )(x_p, wb_p, bb_p, wh_p, bh_p)

    return {"value": q_pad[:B, :action_dim]}


def init_params(key, in_dim, feature_dim, action_dim):
    """Deterministic synthetic parameters (PyTorch Linear is y = x W^T + b;
    here weights are stored pre-transposed as [in, out])."""
    k1, k2, k3 = jax.random.split(key, 3)
    scale_b = 1.0 / jnp.sqrt(in_dim)
    scale_h = 1.0 / jnp.sqrt(feature_dim)
    return {
        "w_body": jax.random.normal(k1, (in_dim, feature_dim), jnp.float32) * scale_b,
        "b_body": jnp.zeros((1, feature_dim), jnp.float32),
        "w_value": jax.random.normal(k2, (feature_dim, 1), jnp.float32) * scale_h,
        "b_value": jnp.zeros((1, 1), jnp.float32),
        "w_adv": jax.random.normal(k3, (feature_dim, action_dim), jnp.float32) * scale_h,
        "b_adv": jnp.zeros((1, action_dim), jnp.float32),
    }


if __name__ == "__main__":
    B, C, H, W = 2, 4, 16, 16
    feature_dim = 32
    action_dim = 6

    key = jax.random.PRNGKey(0)
    k_obs, k_par = jax.random.split(key)
    obs = jax.random.normal(k_obs, (B, C, H, W), jnp.float32)
    params = init_params(k_par, C * H * W, feature_dim, action_dim)

    out = dueling_net_policy(obs, params, action_dim=action_dim)
    q = jax.block_until_ready(out["value"])

    # cross-check against pure-JAX reference (unpadded math)
    x = obs.reshape(B, -1)
    phi = jnp.maximum(x @ params["w_body"] + params["b_body"], 0.0)
    value = phi @ params["w_value"] + params["b_value"]
    adv = phi @ params["w_adv"] + params["b_adv"]
    q_ref = value + (adv - adv.mean(axis=1, keepdims=True))
    assert q.shape == (B, action_dim)
    assert jnp.allclose(q, q_ref, atol=1e-4, rtol=1e-4)

    print("KERNEL_OK")
</pallas_src>

<mosaic_0001>
module attributes {stable_mosaic.version = 11 : i64} {
  func.func @dueling_kernel(%arg0: i32, %arg1: memref<8x1024xf32, #tpu.memory_space<vmem>>, %arg2: memref<1024x128xf32, #tpu.memory_space<vmem>>, %arg3: memref<1x128xf32, #tpu.memory_space<vmem>>, %arg4: memref<128x128xf32, #tpu.memory_space<vmem>>, %arg5: memref<1x128xf32, #tpu.memory_space<vmem>>, %arg6: memref<8x128xf32, #tpu.memory_space<vmem>>) attributes {dimension_semantics = [#tpu.dimension_semantics<parallel>], iteration_bounds = array<i64: 1>, scalar_prefetch = 0 : i64, scratch_operands = 0 : i64, tpu.core_type = #tpu.core_type<tc>, window_params = [{transform_indices = @transform_0, window_bounds = array<i64: 8, 1024>}, {pipeline_mode = #tpu.pipeline_mode<synchronous>, transform_indices = @transform_1, window_bounds = array<i64: 1024, 128>}, {pipeline_mode = #tpu.pipeline_mode<synchronous>, transform_indices = @transform_2, window_bounds = array<i64: 1, 128>}, {pipeline_mode = #tpu.pipeline_mode<synchronous>, transform_indices = @transform_3, window_bounds = array<i64: 128, 128>}, {pipeline_mode = #tpu.pipeline_mode<synchronous>, transform_indices = @transform_4, window_bounds = array<i64: 1, 128>}, {transform_indices = @transform_5, window_bounds = array<i64: 8, 128>}]} {
    %c0 = arith.constant 0 : index
    %c0_0 = arith.constant 0 : index
    %0 = vector.load %arg1[%c0, %c0_0] : memref<8x1024xf32, #tpu.memory_space<vmem>>, vector<8x1024xf32>
    %c0_1 = arith.constant 0 : index
    %c0_2 = arith.constant 0 : index
    %1 = vector.load %arg2[%c0_1, %c0_2] : memref<1024x128xf32, #tpu.memory_space<vmem>>, vector<1024x128xf32>
    %cst = arith.constant dense<0.000000e+00> : vector<8x128xf32>
    %2 = tpu.matmul %0, %1, %cst {dimension_numbers = #tpu.dot_dimension_numbers<[1], [0], [0], [1], [0, 0, 1, 1], [], []>} : vector<8x1024xf32>, vector<1024x128xf32>, vector<8x128xf32> -> vector<8x128xf32>
    %c0_3 = arith.constant 0 : index
    %c0_4 = arith.constant 0 : index
    %3 = vector.load %arg3[%c0_3, %c0_4] : memref<1x128xf32, #tpu.memory_space<vmem>>, vector<1x128xf32>
    %4 = vector.broadcast %3 : vector<1x128xf32> to vector<8x128xf32>
    %5 = arith.addf %2, %4 : vector<8x128xf32>
    %cst_5 = arith.constant 0.000000e+00 : f32
    %6 = vector.broadcast %cst_5 : f32 to vector<8x128xf32>
    %7 = arith.maximumf %5, %6 : vector<8x128xf32>
    %c0_6 = arith.constant 0 : index
    %c0_7 = arith.constant 0 : index
    %8 = vector.load %arg4[%c0_6, %c0_7] : memref<128x128xf32, #tpu.memory_space<vmem>>, vector<128x128xf32>
    %cst_8 = arith.constant dense<0.000000e+00> : vector<8x128xf32>
    %9 = tpu.matmul %7, %8, %cst_8 {dimension_numbers = #tpu.dot_dimension_numbers<[1], [0], [0], [1], [0, 0, 1, 1], [], []>} : vector<8x128xf32>, vector<128x128xf32>, vector<8x128xf32> -> vector<8x128xf32>
    %c0_9 = arith.constant 0 : index
    %c0_10 = arith.constant 0 : index
    %10 = vector.load %arg5[%c0_9, %c0_10] : memref<1x128xf32, #tpu.memory_space<vmem>>, vector<1x128xf32>
    %11 = vector.broadcast %10 : vector<1x128xf32> to vector<8x128xf32>
    %12 = arith.addf %9, %11 : vector<8x128xf32>
    %13 = vector.extract_strided_slice %12 {offsets = [0, 6], sizes = [8, 1], strides = [1, 1]} : vector<8x128xf32> to vector<8x1xf32>
    %cst_11 = arith.constant dense<0.000000e+00> : vector<8xf32>
    %14 = vector.multi_reduction <add>, %12, %cst_11 [1] : vector<8x128xf32> to vector<8xf32>
    %15 = vector.shape_cast %14 : vector<8xf32> to vector<8x1xf32>
    %16 = arith.subf %15, %13 : vector<8x1xf32>
    %cst_12 = arith.constant 0.166666672 : f32
    %17 = vector.broadcast %cst_12 : f32 to vector<8x1xf32>
    %18 = arith.mulf %16, %17 : vector<8x1xf32>
    %19 = vector.broadcast %18 : vector<8x1xf32> to vector<8x128xf32>
    %20 = arith.subf %12, %19 : vector<8x128xf32>
    %21 = vector.broadcast %13 : vector<8x1xf32> to vector<8x128xf32>
    %22 = arith.addf %21, %20 : vector<8x128xf32>
    %c0_13 = arith.constant 0 : index
    %c0_14 = arith.constant 0 : index
    %23 = vector.load %arg6[%c0_13, %c0_14] : memref<8x128xf32, #tpu.memory_space<vmem>>, vector<8x128xf32>
    tpu.vector_store %arg6[%c0_13, %c0_14], %22 {strides = array<i32>} : memref<8x128xf32, #tpu.memory_space<vmem>>, vector<8x128xf32>,
    return
  }
  func.func @transform_0(%arg0: i32) -> (i32, i32) {
    %c0_i32 = arith.constant 0 : i32
    %c0_i32_0 = arith.constant 0 : i32
    return %arg0, %c0_i32 : i32, i32
  }
  func.func @transform_1(%arg0: i32) -> (i32, i32) {
    %c0_i32 = arith.constant 0 : i32
    %c0_i32_0 = arith.constant 0 : i32
    %c0_i32_1 = arith.constant 0 : i32
    return %c0_i32, %c0_i32_0 : i32, i32
  }
  func.func @transform_2(%arg0: i32) -> (i32, i32) {
    %c0_i32 = arith.constant 0 : i32
    %c0_i32_0 = arith.constant 0 : i32
    %c0_i32_1 = arith.constant 0 : i32
    return %c0_i32, %c0_i32_0 : i32, i32
  }
  func.func @transform_3(%arg0: i32) -> (i32, i32) {
    %c0_i32 = arith.constant 0 : i32
    %c0_i32_0 = arith.constant 0 : i32
    %c0_i32_1 = arith.constant 0 : i32
    return %c0_i32, %c0_i32_0 : i32, i32
  }
  func.func @transform_4(%arg0: i32) -> (i32, i32) {
    %c0_i32 = arith.constant 0 : i32
    %c0_i32_0 = arith.constant 0 : i32
    %c0_i32_1 = arith.constant 0 : i32
    return %c0_i32, %c0_i32_0 : i32, i32
  }
  func.func @transform_5(%arg0: i32) -> (i32, i32) {
    %c0_i32 = arith.constant 0 : i32
    %c0_i32_0 = arith.constant 0 : i32
    return %arg0, %c0_i32 : i32, i32
  }
}

</mosaic_0001>

<llo_original>
// kernel: tpu_custom_call.1
$region0: #{tpu_custom_call.1}
  #allocation0 [shape = 'u32[]', space=smem, size = 0x4, offset = 0x4, fixed_abs, tag = 'smem constant byte address 0x4 - core index']
  #allocation1 [shape = 'u32[144,128]{1,0:T(1,128)}', space=vmem, size = 0x12000, scoped, tag = 'internal scratch']
  %s0 = inlined_call_operand.hbm [shape: f32[8,1024], index: 0, kind: input, shape index: {}]
  %s1 = inlined_call_operand.hbm [shape: f32[1024,128], index: 1, kind: input, shape index: {}]
  %s2 = inlined_call_operand.vmem [shape: f32[1,128], index: 2, kind: input, shape index: {}]
  %s3 = inlined_call_operand.hbm [shape: f32[128,128], index: 3, kind: input, shape index: {}]
  %s4 = inlined_call_operand.vmem [shape: f32[1,128], index: 4, kind: input, shape index: {}]
  %s5 = inlined_call_operand.hbm [shape: f32[8,128], index: 5, kind: output, shape index: {}]
  %s6 = sld [smem:[#allocation0]]
  $region42: #{tpu_custom_call.1} parent=0
    _
  %s8 = ssub.s32 1, %s6
  %s9 = scalar_select 0, %s8, %s6
  $region1: #{tpu_custom_call.1} parent=0
    #allocation2 [shape = 'u8[32768]{0}', space=vmem, size = 0x8000, scoped, tag = 'input window, operand 0, single buffered']
    #allocation3 [shape = 's32[1]{0}', space=sflag, size = 0x4, scoped, tag = 'scoped memory for tpu_custom_call.1']
    #allocation4 [shape = 's32[1]{0}', space=sflag, size = 0x4, scoped, tag = 'scoped memory for tpu_custom_call.1']
    #allocation5 [shape = 'u8[524288]{0}', space=vmem, size = 0x80000, scoped, tag = 'input window, operand 1, single buffered']
    #allocation6 [shape = 's32[1]{0}', space=sflag, size = 0x4, scoped, tag = 'scoped memory for tpu_custom_call.1']
    #allocation7 [shape = 'u8[65536]{0}', space=vmem, size = 0x10000, scoped, tag = 'input window, operand 3, single buffered']
    #allocation8 [shape = 'u8[4096]{0}', space=vmem, size = 0x1000, scoped, tag = 'output window, operand 0, single buffered']
    %10 = vsyncpa [#allocation3], 0
    %11 = vsyncpa [#allocation6], 0
    %12 = vsyncpa [#allocation4], 0
    // Predicated region
    $region2: #{tpu_custom_call.1} parent=1 // pred_check
      _
    $region3: #{tpu_custom_call.1} parent=1 // pred_check_branch
      %14 = sbr.rel (0) target = $region5
    $region4: #{tpu_custom_call.1} parent=1 // pred_region
      %s16 = ssub.s32 1024, 1024
      %17 = vsyncadd [#allocation3], %s16
      %s19 = sshll.u32 [#allocation2], 4
      %s20 = int_to_ptr.vmem [resolvable:$true] %s19
      %22 = dma.hbm_to_vmem [thread:$0]  %s0, 1024, %s20, [#allocation3]
    $region5: #{tpu_custom_call.1} parent=1 // pred_fallthru
      _
    // Predicated region
    $region6: #{tpu_custom_call.1} parent=1 // pred_check
      _
    $region7: #{tpu_custom_call.1} parent=1 // pred_check_branch
      %24 = sbr.rel (0) target = $region9
    $region8: #{tpu_custom_call.1} parent=1 // pred_region
      %s26 = ssub.s32 16384, 16384
      %27 = vsyncadd [#allocation6], %s26
      %s28 = sshll.u32 [#allocation5], 4
      %s29 = int_to_ptr.vmem [resolvable:$true] %s28
      %34 = dma.hbm_to_vmem [thread:$0]  %s1, 16384, %s29, [#allocation6], 128, 128, 8
    $region9: #{tpu_custom_call.1} parent=1 // pred_fallthru
      _
    // Predicated region
    $region10: #{tpu_custom_call.1} parent=1 // pred_check
      _
    $region11: #{tpu_custom_call.1} parent=1 // pred_check_branch
      %36 = sbr.rel (0) target = $region13
    $region12: #{tpu_custom_call.1} parent=1 // pred_region
      _
    $region13: #{tpu_custom_call.1} parent=1 // pred_fallthru
      _
    // Predicated region
    $region14: #{tpu_custom_call.1} parent=1 // pred_check
      _
    $region15: #{tpu_custom_call.1} parent=1 // pred_check_branch
      %38 = sbr.rel (0) target = $region17
    $region16: #{tpu_custom_call.1} parent=1 // pred_region
      %s40 = ssub.s32 2048, 2048
      %41 = vsyncadd [#allocation6], %s40
      %s42 = sshll.u32 [#allocation7], 4
      %s43 = int_to_ptr.vmem [resolvable:$true] %s42
      %48 = dma.hbm_to_vmem [thread:$0]  %s3, 2048, %s43, [#allocation6], 128, 128, 8
    $region17: #{tpu_custom_call.1} parent=1 // pred_fallthru
      _
    // Predicated region
    $region18: #{tpu_custom_call.1} parent=1 // pred_check
      _
    $region19: #{tpu_custom_call.1} parent=1 // pred_check_branch
      %50 = sbr.rel (0) target = $region21
    $region20: #{tpu_custom_call.1} parent=1 // pred_region
      _
    $region21: #{tpu_custom_call.1} parent=1 // pred_fallthru
      _
    // Predicated region
    $region22: #{tpu_custom_call.1} parent=1 // pred_check
      _
    $region23: #{tpu_custom_call.1} parent=1 // pred_check_branch
      %52 = sbr.rel (0) target = $region25
    $region24: #{tpu_custom_call.1} parent=1 // pred_region
      %53 = dma.done [#allocation3], 1024
    $region25: #{tpu_custom_call.1} parent=1 // pred_fallthru
      _
    // Predicated region
    $region26: #{tpu_custom_call.1} parent=1 // pred_check
      _
    $region27: #{tpu_custom_call.1} parent=1 // pred_check_branch
      %55 = sbr.rel (0) target = $region29
    $region28: #{tpu_custom_call.1} parent=1 // pred_region
      %56 = dma.done [#allocation6], 16384
    $region29: #{tpu_custom_call.1} parent=1 // pred_fallthru
      _
    // Predicated region
    $region30: #{tpu_custom_call.1} parent=1 // pred_check
      _
    $region31: #{tpu_custom_call.1} parent=1 // pred_check_branch
      %58 = sbr.rel (0) target = $region33
    $region32: #{tpu_custom_call.1} parent=1 // pred_region
      %59 = dma.done [#allocation6], 2048
    $region33: #{tpu_custom_call.1} parent=1 // pred_fallthru
      _
    %v60 = vld [vmem:[#allocation2] sm:$0xff]
    %v61 = vld [vmem:[#allocation2 + $0x8] sm:$0xff]
    %v62 = vld [vmem:[#allocation2 + $0x10] sm:$0xff]
    %v63 = vld [vmem:[#allocation2 + $0x18] sm:$0xff]
    %v64 = vld [vmem:[#allocation2 + $0x20] sm:$0xff]
    %v65 = vld [vmem:[#allocation2 + $0x28] sm:$0xff]
    %v66 = vld [vmem:[#allocation2 + $0x30] sm:$0xff]
    %v67 = vld [vmem:[#allocation2 + $0x38] sm:$0xff]
    %v68 = vld [vmem:[#allocation5] sm:$0xff]
    %v69 = vld [vmem:[#allocation5 + $0x8] sm:$0xff]
    %v70 = vld [vmem:[#allocation5 + $0x10] sm:$0xff]
    %v71 = vld [vmem:[#allocation5 + $0x18] sm:$0xff]
    %v72 = vld [vmem:[#allocation5 + $0x20] sm:$0xff]
    %v73 = vld [vmem:[#allocation5 + $0x28] sm:$0xff]
    %v74 = vld [vmem:[#allocation5 + $0x30] sm:$0xff]
    %v75 = vld [vmem:[#allocation5 + $0x38] sm:$0xff]
    %v76 = vld [vmem:[#allocation5 + $0x40] sm:$0xff]
    %v77 = vld [vmem:[#allocation5 + $0x48] sm:$0xff]
    %v78 = vld [vmem:[#allocation5 + $0x50] sm:$0xff]
    %v79 = vld [vmem:[#allocation5 + $0x58] sm:$0xff]
    %v80 = vld [vmem:[#allocation5 + $0x60] sm:$0xff]
    %v81 = vld [vmem:[#allocation5 + $0x68] sm:$0xff]
    %v82 = vld [vmem:[#allocation5 + $0x70] sm:$0xff]
    %v83 = vld [vmem:[#allocation5 + $0x78] sm:$0xff]
    %v84 = vld [vmem:[#allocation5 + $0x80] sm:$0xff]
    %v85 = vld [vmem:[#allocation5 + $0x88] sm:$0xff]
    %v86 = vld [vmem:[#allocation5 + $0x90] sm:$0xff]
    %v87 = vld [vmem:[#allocation5 + $0x98] sm:$0xff]
    %v88 = vld [vmem:[#allocation5 + $0xa0] sm:$0xff]
    %v89 = vld [vmem:[#allocation5 + $0xa8] sm:$0xff]
    %v90 = vld [vmem:[#allocation5 + $0xb0] sm:$0xff]
    %v91 = vld [vmem:[#allocation5 + $0xb8] sm:$0xff]
    %v92 = vld [vmem:[#allocation5 + $0xc0] sm:$0xff]
    %v93 = vld [vmem:[#allocation5 + $0xc8] sm:$0xff]
    %v94 = vld [vmem:[#allocation5 + $0xd0] sm:$0xff]
    %v95 = vld [vmem:[#allocation5 + $0xd8] sm:$0xff]
    %v96 = vld [vmem:[#allocation5 + $0xe0] sm:$0xff]
    %v97 = vld [vmem:[#allocation5 + $0xe8] sm:$0xff]
    %v98 = vld [vmem:[#allocation5 + $0xf0] sm:$0xff]
    %v99 = vld [vmem:[#allocation5 + $0xf8] sm:$0xff]
    %v100 = vld [vmem:[#allocation5 + $0x100] sm:$0xff]
    %v101 = vld [vmem:[#allocation5 + $0x108] sm:$0xff]
    %v102 = vld [vmem:[#allocation5 + $0x110] sm:$0xff]
    %v103 = vld [vmem:[#allocation5 + $0x118] sm:$0xff]
    %v104 = vld [vmem:[#allocation5 + $0x120] sm:$0xff]
    %v105 = vld [vmem:[#allocation5 + $0x128] sm:$0xff]
    %v106 = vld [vmem:[#allocation5 + $0x130] sm:$0xff]
    %v107 = vld [vmem:[#allocation5 + $0x138] sm:$0xff]
    %v108 = vld [vmem:[#allocation5 + $0x140] sm:$0xff]
    %v109 = vld [vmem:[#allocation5 + $0x148] sm:$0xff]
    %v110 = vld [vmem:[#allocation5 + $0x150] sm:$0xff]
    %v111 = vld [vmem:[#allocation5 + $0x158] sm:$0xff]
    %v112 = vld [vmem:[#allocation5 + $0x160] sm:$0xff]
    %v113 = vld [vmem:[#allocation5 + $0x168] sm:$0xff]
    %v114 = vld [vmem:[#allocation5 + $0x170] sm:$0xff]
    %v115 = vld [vmem:[#allocation5 + $0x178] sm:$0xff]
    %v116 = vld [vmem:[#allocation5 + $0x180] sm:$0xff]
    %v117 = vld [vmem:[#allocation5 + $0x188] sm:$0xff]
    %v118 = vld [vmem:[#allocation5 + $0x190] sm:$0xff]
    %v119 = vld [vmem:[#allocation5 + $0x198] sm:$0xff]
    %v120 = vld [vmem:[#allocation5 + $0x1a0] sm:$0xff]
    %v121 = vld [vmem:[#allocation5 + $0x1a8] sm:$0xff]
    %v122 = vld [vmem:[#allocation5 + $0x1b0] sm:$0xff]
    %v123 = vld [vmem:[#allocation5 + $0x1b8] sm:$0xff]
    %v124 = vld [vmem:[#allocation5 + $0x1c0] sm:$0xff]
    %v125 = vld [vmem:[#allocation5 + $0x1c8] sm:$0xff]
    %v126 = vld [vmem:[#allocation5 + $0x1d0] sm:$0xff]
    %v127 = vld [vmem:[#allocation5 + $0x1d8] sm:$0xff]
    %v128 = vld [vmem:[#allocation5 + $0x1e0] sm:$0xff]
    %v129 = vld [vmem:[#allocation5 + $0x1e8] sm:$0xff]
    %v130 = vld [vmem:[#allocation5 + $0x1f0] sm:$0xff]
    %v131 = vld [vmem:[#allocation5 + $0x1f8] sm:$0xff]
    %v132 = vld [vmem:[#allocation5 + $0x200] sm:$0xff]
    %v133 = vld [vmem:[#allocation5 + $0x208] sm:$0xff]
    %v134 = vld [vmem:[#allocation5 + $0x210] sm:$0xff]
    %v135 = vld [vmem:[#allocation5 + $0x218] sm:$0xff]
    %v136 = vld [vmem:[#allocation5 + $0x220] sm:$0xff]
    %v137 = vld [vmem:[#allocation5 + $0x228] sm:$0xff]
    %v138 = vld [vmem:[#allocation5 + $0x230] sm:$0xff]
    %v139 = vld [vmem:[#allocation5 + $0x238] sm:$0xff]
    %v140 = vld [vmem:[#allocation5 + $0x240] sm:$0xff]
    %v141 = vld [vmem:[#allocation5 + $0x248] sm:$0xff]
    %v142 = vld [vmem:[#allocation5 + $0x250] sm:$0xff]
    %v143 = vld [vmem:[#allocation5 + $0x258] sm:$0xff]
    %v144 = vld [vmem:[#allocation5 + $0x260] sm:$0xff]
    %v145 = vld [vmem:[#allocation5 + $0x268] sm:$0xff]
    %v146 = vld [vmem:[#allocation5 + $0x270] sm:$0xff]
    %v147 = vld [vmem:[#allocation5 + $0x278] sm:$0xff]
    %v148 = vld [vmem:[#allocation5 + $0x280] sm:$0xff]
    %v149 = vld [vmem:[#allocation5 + $0x288] sm:$0xff]
    %v150 = vld [vmem:[#allocation5 + $0x290] sm:$0xff]
    %v151 = vld [vmem:[#allocation5 + $0x298] sm:$0xff]
    %v152 = vld [vmem:[#allocation5 + $0x2a0] sm:$0xff]
    %v153 = vld [vmem:[#allocation5 + $0x2a8] sm:$0xff]
    %v154 = vld [vmem:[#allocation5 + $0x2b0] sm:$0xff]
    %v155 = vld [vmem:[#allocation5 + $0x2b8] sm:$0xff]
    %v156 = vld [vmem:[#allocation5 + $0x2c0] sm:$0xff]
    %v157 = vld [vmem:[#allocation5 + $0x2c8] sm:$0xff]
    %v158 = vld [vmem:[#allocation5 + $0x2d0] sm:$0xff]
    %v159 = vld [vmem:[#allocation5 + $0x2d8] sm:$0xff]
    %v160 = vld [vmem:[#allocation5 + $0x2e0] sm:$0xff]
    %v161 = vld [vmem:[#allocation5 + $0x2e8] sm:$0xff]
    %v162 = vld [vmem:[#allocation5 + $0x2f0] sm:$0xff]
    %v163 = vld [vmem:[#allocation5 + $0x2f8] sm:$0xff]
    %v164 = vld [vmem:[#allocation5 + $0x300] sm:$0xff]
    %v165 = vld [vmem:[#allocation5 + $0x308] sm:$0xff]
    %v166 = vld [vmem:[#allocation5 + $0x310] sm:$0xff]
    %v167 = vld [vmem:[#allocation5 + $0x318] sm:$0xff]
    %v168 = vld [vmem:[#allocation5 + $0x320] sm:$0xff]
    %v169 = vld [vmem:[#allocation5 + $0x328] sm:$0xff]
    %v170 = vld [vmem:[#allocation5 + $0x330] sm:$0xff]
    %v171 = vld [vmem:[#allocation5 + $0x338] sm:$0xff]
    %v172 = vld [vmem:[#allocation5 + $0x340] sm:$0xff]
    %v173 = vld [vmem:[#allocation5 + $0x348] sm:$0xff]
    %v174 = vld [vmem:[#allocation5 + $0x350] sm:$0xff]
    %v175 = vld [vmem:[#allocation5 + $0x358] sm:$0xff]
    %v176 = vld [vmem:[#allocation5 + $0x360] sm:$0xff]
    %v177 = vld [vmem:[#allocation5 + $0x368] sm:$0xff]
    %v178 = vld [vmem:[#allocation5 + $0x370] sm:$0xff]
    %v179 = vld [vmem:[#allocation5 + $0x378] sm:$0xff]
    %v180 = vld [vmem:[#allocation5 + $0x380] sm:$0xff]
    %v181 = vld [vmem:[#allocation5 + $0x388] sm:$0xff]
    %v182 = vld [vmem:[#allocation5 + $0x390] sm:$0xff]
    %v183 = vld [vmem:[#allocation5 + $0x398] sm:$0xff]
    %v184 = vld [vmem:[#allocation5 + $0x3a0] sm:$0xff]
    %v185 = vld [vmem:[#allocation5 + $0x3a8] sm:$0xff]
    %v186 = vld [vmem:[#allocation5 + $0x3b0] sm:$0xff]
    %v187 = vld [vmem:[#allocation5 + $0x3b8] sm:$0xff]
    %v188 = vld [vmem:[#allocation5 + $0x3c0] sm:$0xff]
    %v189 = vld [vmem:[#allocation5 + $0x3c8] sm:$0xff]
    %v190 = vld [vmem:[#allocation5 + $0x3d0] sm:$0xff]
    %v191 = vld [vmem:[#allocation5 + $0x3d8] sm:$0xff]
    %v192 = vld [vmem:[#allocation5 + $0x3e0] sm:$0xff]
    %v193 = vld [vmem:[#allocation5 + $0x3e8] sm:$0xff]
    %v194 = vld [vmem:[#allocation5 + $0x3f0] sm:$0xff]
    %v195 = vld [vmem:[#allocation5 + $0x3f8] sm:$0xff]
    %v196 = vld [vmem:[%s2] sm:$0x1]
    %v198 = vlaneseq
    %v199 = vshrl.u32 %v198, 7
    %v200 = vsub.s32 0, %v199
    %v201 = vrot.slane %v196, %v200
    %203 = vmatprep.subr.mxu0 0.0
    %204 = vmatpush1.msra.mxu0 %v83
    %205 = vmatprep.subr.mxu0 0.0
    %206 = vmatpush1.msra.mxu0 %v82
    %207 = vmatprep.subr.mxu0 0.0
    %208 = vmatpush1.msra.mxu0 %v81
    %209 = vmatprep.subr.mxu0 0.0
    %210 = vmatpush1.msra.mxu0 %v80
    %211 = vmatprep.subr.mxu0 0.0
    %212 = vmatpush1.msra.mxu0 %v79
    %213 = vmatprep.subr.mxu0 0.0
    %214 = vmatpush1.msra.mxu0 %v78
    %215 = vmatprep.subr.mxu0 0.0
    %216 = vmatpush1.msra.mxu0 %v77
    %217 = vmatprep.subr.mxu0 0.0
    %218 = vmatpush1.msra.mxu0 %v76
    %219 = vmatprep.subr.mxu0 0.0
    %220 = vmatpush1.msra.mxu0 %v75
    %221 = vmatprep.subr.mxu0 0.0
    %222 = vmatpush1.msra.mxu0 %v74
    %223 = vmatprep.subr.mxu0 0.0
    %224 = vmatpush1.msra.mxu0 %v73
    %225 = vmatprep.subr.mxu0 0.0
    %226 = vmatpush1.msra.mxu0 %v72
    %227 = vmatprep.subr.mxu0 0.0
    %228 = vmatpush1.msra.mxu0 %v71
    %229 = vmatprep.subr.mxu0 0.0
    %230 = vmatpush1.msra.mxu0 %v70
    %231 = vmatprep.subr.mxu0 0.0
    %232 = vmatpush1.msra.mxu0 %v69
    %233 = vmatprep.subr.mxu0 0.0
    %234 = vmatpush1.msra.mxu0 %v68
    %235 = vmatprep.subr.mxu0 0.0
    %236 = vmatpush2.msra.mxu0 %v99
    %237 = vmatprep.subr.mxu0 0.0
    %238 = vmatpush2.msra.mxu0 %v98
    %239 = vmatprep.subr.mxu0 0.0
    %240 = vmatpush2.msra.mxu0 %v97
    %241 = vmatprep.subr.mxu0 0.0
    %242 = vmatpush2.msra.mxu0 %v96
    %243 = vmatprep.subr.mxu0 0.0
    %244 = vmatpush2.msra.mxu0 %v95
    %245 = vmatprep.subr.mxu0 0.0
    %246 = vmatpush2.msra.mxu0 %v94
    %247 = vmatprep.subr.mxu0 0.0
    %248 = vmatpush2.msra.mxu0 %v93
    %249 = vmatprep.subr.mxu0 0.0
    %250 = vmatpush2.msra.mxu0 %v92
    %251 = vmatprep.subr.mxu0 0.0
    %252 = vmatpush2.msra.mxu0 %v91
    %253 = vmatprep.subr.mxu0 0.0
    %254 = vmatpush2.msra.mxu0 %v90
    %255 = vmatprep.subr.mxu0 0.0
    %256 = vmatpush2.msra.mxu0 %v89
    %257 = vmatprep.subr.mxu0 0.0
    %258 = vmatpush2.msra.mxu0 %v88
    %259 = vmatprep.subr.mxu0 0.0
    %260 = vmatpush2.msra.mxu0 %v87
    %261 = vmatprep.subr.mxu0 0.0
    %262 = vmatpush2.msra.mxu0 %v86
    %263 = vmatprep.subr.mxu0 0.0
    %264 = vmatpush2.msra.mxu0 %v85
    %265 = vmatprep.subr.mxu0 0.0
    %266 = vmatpush2.msra.mxu0 %v84
    %267 = vmatprep.mubr.f32.mxu0 %v61
    %268 = vmatmul.mubr.f32.gmra.mxu0 %v60
    %v269 = vpop.f32.mrf.mxu0
    %v270 = vadd.f32 %v201, %v269
    %v271 = vpop.f32.mrf.mxu0
    %272 = vdwg.mxu0
    %273 = vmatprep.subr.mxu0 0.0
    %274 = vmatpush1.msra.mxu0 %v115
    %275 = vmatprep.subr.mxu0 0.0
    %276 = vmatpush1.msra.mxu0 %v114
    %277 = vmatprep.subr.mxu0 0.0
    %278 = vmatpush1.msra.mxu0 %v113
    %279 = vmatprep.subr.mxu0 0.0
    %280 = vmatpush1.msra.mxu0 %v112
    %281 = vmatprep.subr.mxu0 0.0
    %282 = vmatpush1.msra.mxu0 %v111
    %283 = vmatprep.subr.mxu0 0.0
    %284 = vmatpush1.msra.mxu0 %v110
    %285 = vmatprep.subr.mxu0 0.0
    %286 = vmatpush1.msra.mxu0 %v109
    %287 = vmatprep.subr.mxu0 0.0
    %288 = vmatpush1.msra.mxu0 %v108
    %289 = vmatprep.subr.mxu0 0.0
    %290 = vmatpush1.msra.mxu0 %v107
    %291 = vmatprep.subr.mxu0 0.0
    %292 = vmatpush1.msra.mxu0 %v106
    %293 = vmatprep.subr.mxu0 0.0
    %294 = vmatpush1.msra.mxu0 %v105
    %295 = vmatprep.subr.mxu0 0.0
    %296 = vmatpush1.msra.mxu0 %v104
    %297 = vmatprep.subr.mxu0 0.0
    %298 = vmatpush1.msra.mxu0 %v103
    %299 = vmatprep.subr.mxu0 0.0
    %300 = vmatpush1.msra.mxu0 %v102
    %301 = vmatprep.subr.mxu0 0.0
    %302 = vmatpush1.msra.mxu0 %v101
    %303 = vmatprep.subr.mxu0 0.0
    %304 = vmatpush1.msra.mxu0 %v100
    %305 = vmatprep.subr.mxu0 0.0
    %306 = vmatpush2.msra.mxu0 %v131
    %307 = vmatprep.subr.mxu0 0.0
    %308 = vmatpush2.msra.mxu0 %v130
    %309 = vmatprep.subr.mxu0 0.0
    %310 = vmatpush2.msra.mxu0 %v129
    %311 = vmatprep.subr.mxu0 0.0
    %312 = vmatpush2.msra.mxu0 %v128
    %313 = vmatprep.subr.mxu0 0.0
    %314 = vmatpush2.msra.mxu0 %v127
    %315 = vmatprep.subr.mxu0 0.0
    %316 = vmatpush2.msra.mxu0 %v126
    %317 = vmatprep.subr.mxu0 0.0
    %318 = vmatpush2.msra.mxu0 %v125
    %319 = vmatprep.subr.mxu0 0.0
    %320 = vmatpush2.msra.mxu0 %v124
    %321 = vmatprep.subr.mxu0 0.0
    %322 = vmatpush2.msra.mxu0 %v123
    %323 = vmatprep.subr.mxu0 0.0
    %324 = vmatpush2.msra.mxu0 %v122
    %325 = vmatprep.subr.mxu0 0.0
    %326 = vmatpush2.msra.mxu0 %v121
    %327 = vmatprep.subr.mxu0 0.0
    %328 = vmatpush2.msra.mxu0 %v120
    %329 = vmatprep.subr.mxu0 0.0
    %330 = vmatpush2.msra.mxu0 %v119
    %331 = vmatprep.subr.mxu0 0.0
    %332 = vmatpush2.msra.mxu0 %v118
    %333 = vmatprep.subr.mxu0 0.0
    %334 = vmatpush2.msra.mxu0 %v117
    %335 = vmatprep.subr.mxu0 0.0
    %336 = vmatpush2.msra.mxu0 %v116
    %337 = vmatprep.mubr.f32.mxu0 %v63
    %338 = vmatmul.mubr.f32.gmra.mxu0 %v62
    %v339 = vpop.f32.mrf.mxu0
    %v340 = vadd.f32 %v270, %v339
    %v341 = vpop.f32.mrf.mxu0
    %342 = vdwg.mxu0
    %343 = vmatprep.subr.mxu0 0.0
    %344 = vmatpush1.msra.mxu0 %v147
    %345 = vmatprep.subr.mxu0 0.0
    %346 = vmatpush1.msra.mxu0 %v146
    %347 = vmatprep.subr.mxu0 0.0
    %348 = vmatpush1.msra.mxu0 %v145
    %349 = vmatprep.subr.mxu0 0.0
    %350 = vmatpush1.msra.mxu0 %v144
    %351 = vmatprep.subr.mxu0 0.0
    %352 = vmatpush1.msra.mxu0 %v143
    %353 = vmatprep.subr.mxu0 0.0
    %354 = vmatpush1.msra.mxu0 %v142
    %355 = vmatprep.subr.mxu0 0.0
    %356 = vmatpush1.msra.mxu0 %v141
    %357 = vmatprep.subr.mxu0 0.0
    %358 = vmatpush1.msra.mxu0 %v140
    %359 = vmatprep.subr.mxu0 0.0
    %360 = vmatpush1.msra.mxu0 %v139
    %361 = vmatprep.subr.mxu0 0.0
    %362 = vmatpush1.msra.mxu0 %v138
    %363 = vmatprep.subr.mxu0 0.0
    %364 = vmatpush1.msra.mxu0 %v137
    %365 = vmatprep.subr.mxu0 0.0
    %366 = vmatpush1.msra.mxu0 %v136
    %367 = vmatprep.subr.mxu0 0.0
    %368 = vmatpush1.msra.mxu0 %v135
    %369 = vmatprep.subr.mxu0 0.0
    %370 = vmatpush1.msra.mxu0 %v134
    %371 = vmatprep.subr.mxu0 0.0
    %372 = vmatpush1.msra.mxu0 %v133
    %373 = vmatprep.subr.mxu0 0.0
    %374 = vmatpush1.msra.mxu0 %v132
    %375 = vmatprep.subr.mxu0 0.0
    %376 = vmatpush2.msra.mxu0 %v163
    %377 = vmatprep.subr.mxu0 0.0
    %378 = vmatpush2.msra.mxu0 %v162
    %379 = vmatprep.subr.mxu0 0.0
    %380 = vmatpush2.msra.mxu0 %v161
    %381 = vmatprep.subr.mxu0 0.0
    %382 = vmatpush2.msra.mxu0 %v160
    %383 = vmatprep.subr.mxu0 0.0
    %384 = vmatpush2.msra.mxu0 %v159
    %385 = vmatprep.subr.mxu0 0.0
    %386 = vmatpush2.msra.mxu0 %v158
    %387 = vmatprep.subr.mxu0 0.0
    %388 = vmatpush2.msra.mxu0 %v157
    %389 = vmatprep.subr.mxu0 0.0
    %390 = vmatpush2.msra.mxu0 %v156
    %391 = vmatprep.subr.mxu0 0.0
    %392 = vmatpush2.msra.mxu0 %v155
    %393 = vmatprep.subr.mxu0 0.0
    %394 = vmatpush2.msra.mxu0 %v154
    %395 = vmatprep.subr.mxu0 0.0
    %396 = vmatpush2.msra.mxu0 %v153
    %397 = vmatprep.subr.mxu0 0.0
    %398 = vmatpush2.msra.mxu0 %v152
    %399 = vmatprep.subr.mxu0 0.0
    %400 = vmatpush2.msra.mxu0 %v151
    %401 = vmatprep.subr.mxu0 0.0
    %402 = vmatpush2.msra.mxu0 %v150
    %403 = vmatprep.subr.mxu0 0.0
    %404 = vmatpush2.msra.mxu0 %v149
    %405 = vmatprep.subr.mxu0 0.0
    %406 = vmatpush2.msra.mxu0 %v148
    %407 = vmatprep.mubr.f32.mxu0 %v65
    %408 = vmatmul.mubr.f32.gmra.mxu0 %v64
    %v409 = vpop.f32.mrf.mxu0
    %v410 = vadd.f32 %v340, %v409
    %v411 = vpop.f32.mrf.mxu0
    %412 = vdwg.mxu0
    %413 = vmatprep.subr.mxu0 0.0
    %414 = vmatpush1.msra.mxu0 %v179
    %415 = vmatprep.subr.mxu0 0.0
    %416 = vmatpush1.msra.mxu0 %v178
    %417 = vmatprep.subr.mxu0 0.0
    %418 = vmatpush1.msra.mxu0 %v177
    %419 = vmatprep.subr.mxu0 0.0
    %420 = vmatpush1.msra.mxu0 %v176
    %421 = vmatprep.subr.mxu0 0.0
    %422 = vmatpush1.msra.mxu0 %v175
    %423 = vmatprep.subr.mxu0 0.0
    %424 = vmatpush1.msra.mxu0 %v174
    %425 = vmatprep.subr.mxu0 0.0
    %426 = vmatpush1.msra.mxu0 %v173
    %427 = vmatprep.subr.mxu0 0.0
    %428 = vmatpush1.msra.mxu0 %v172
    %429 = vmatprep.subr.mxu0 0.0
    %430 = vmatpush1.msra.mxu0 %v171
    %431 = vmatprep.subr.mxu0 0.0
    %432 = vmatpush1.msra.mxu0 %v170
    %433 = vmatprep.subr.mxu0 0.0
    %434 = vmatpush1.msra.mxu0 %v169
    %435 = vmatprep.subr.mxu0 0.0
    %436 = vmatpush1.msra.mxu0 %v168
    %437 = vmatprep.subr.mxu0 0.0
    %438 = vmatpush1.msra.mxu0 %v167
    %439 = vmatprep.subr.mxu0 0.0
    %440 = vmatpush1.msra.mxu0 %v166
    %441 = vmatprep.subr.mxu0 0.0
    %442 = vmatpush1.msra.mxu0 %v165
    %443 = vmatprep.subr.mxu0 0.0
    %444 = vmatpush1.msra.mxu0 %v164
    %445 = vmatprep.subr.mxu0 0.0
    %446 = vmatpush2.msra.mxu0 %v195
    %447 = vmatprep.subr.mxu0 0.0
    %448 = vmatpush2.msra.mxu0 %v194
    %449 = vmatprep.subr.mxu0 0.0
    %450 = vmatpush2.msra.mxu0 %v193
    %451 = vmatprep.subr.mxu0 0.0
    %452 = vmatpush2.msra.mxu0 %v192
    %453 = vmatprep.subr.mxu0 0.0
    %454 = vmatpush2.msra.mxu0 %v191
    %455 = vmatprep.subr.mxu0 0.0
    %456 = vmatpush2.msra.mxu0 %v190
    %457 = vmatprep.subr.mxu0 0.0
    %458 = vmatpush2.msra.mxu0 %v189
    %459 = vmatprep.subr.mxu0 0.0
    %460 = vmatpush2.msra.mxu0 %v188
    %461 = vmatprep.subr.mxu0 0.0
    %462 = vmatpush2.msra.mxu0 %v187
    %463 = vmatprep.subr.mxu0 0.0
    %464 = vmatpush2.msra.mxu0 %v186
    %465 = vmatprep.subr.mxu0 0.0
    %466 = vmatpush2.msra.mxu0 %v185
    %467 = vmatprep.subr.mxu0 0.0
    %468 = vmatpush2.msra.mxu0 %v184
    %469 = vmatprep.subr.mxu0 0.0
    %470 = vmatpush2.msra.mxu0 %v183
    %471 = vmatprep.subr.mxu0 0.0
    %472 = vmatpush2.msra.mxu0 %v182
    %473 = vmatprep.subr.mxu0 0.0
    %474 = vmatpush2.msra.mxu0 %v181
    %475 = vmatprep.subr.mxu0 0.0
    %476 = vmatpush2.msra.mxu0 %v180
    %477 = vmatprep.mubr.f32.mxu0 %v67
    %478 = vmatmul.mubr.f32.gmra.mxu0 %v66
    %v479 = vpop.f32.mrf.mxu0
    %v480 = vadd.f32 %v410, %v479
    %v481 = vpop.f32.mrf.mxu0
    %482 = vdwg.mxu0
    %v483 = vmax.f32 %v480, 0.0
    %v484 = vld [vmem:[#allocation7] sm:$0xff]
    %v485 = vld [vmem:[#allocation7 + $0x8] sm:$0xff]
    %v486 = vld [vmem:[#allocation7 + $0x10] sm:$0xff]
    %v487 = vld [vmem:[#allocation7 + $0x18] sm:$0xff]
    %v488 = vld [vmem:[#allocation7 + $0x20] sm:$0xff]
    %v489 = vld [vmem:[#allocation7 + $0x28] sm:$0xff]
    %v490 = vld [vmem:[#allocation7 + $0x30] sm:$0xff]
    %v491 = vld [vmem:[#allocation7 + $0x38] sm:$0xff]
    %v492 = vld [vmem:[#allocation7 + $0x40] sm:$0xff]
    %v493 = vld [vmem:[#allocation7 + $0x48] sm:$0xff]
    %v494 = vld [vmem:[#allocation7 + $0x50] sm:$0xff]
    %v495 = vld [vmem:[#allocation7 + $0x58] sm:$0xff]
    %v496 = vld [vmem:[#allocation7 + $0x60] sm:$0xff]
    %v497 = vld [vmem:[#allocation7 + $0x68] sm:$0xff]
    %v498 = vld [vmem:[#allocation7 + $0x70] sm:$0xff]
    %v499 = vld [vmem:[#allocation7 + $0x78] sm:$0xff]
    %v500 = vld [vmem:[%s4] sm:$0x1]
    %v502 = vlaneseq
    %v503 = vshrl.u32 %v502, 7
    %v504 = vsub.s32 0, %v503
    %v505 = vrot.slane %v500, %v504
    %507 = vmatprep.subr.mxu0 0.0
    %508 = vmatpush1.msra.mxu0 %v499
    %509 = vmatprep.subr.mxu0 0.0
    %510 = vmatpush1.msra.mxu0 %v498
    %511 = vmatprep.subr.mxu0 0.0
    %512 = vmatpush1.msra.mxu0 %v497
    %513 = vmatprep.subr.mxu0 0.0
    %514 = vmatpush1.msra.mxu0 %v496
    %515 = vmatprep.subr.mxu0 0.0
    %516 = vmatpush1.msra.mxu0 %v495
    %517 = vmatprep.subr.mxu0 0.0
    %518 = vmatpush1.msra.mxu0 %v494
    %519 = vmatprep.subr.mxu0 0.0
    %520 = vmatpush1.msra.mxu0 %v493
    %521 = vmatprep.subr.mxu0 0.0
    %522 = vmatpush1.msra.mxu0 %v492
    %523 = vmatprep.subr.mxu0 0.0
    %524 = vmatpush1.msra.mxu0 %v491
    %525 = vmatprep.subr.mxu0 0.0
    %526 = vmatpush1.msra.mxu0 %v490
    %527 = vmatprep.subr.mxu0 0.0
    %528 = vmatpush1.msra.mxu0 %v489
    %529 = vmatprep.subr.mxu0 0.0
    %530 = vmatpush1.msra.mxu0 %v488
    %531 = vmatprep.subr.mxu0 0.0
    %532 = vmatpush1.msra.mxu0 %v487
    %533 = vmatprep.subr.mxu0 0.0
    %534 = vmatpush1.msra.mxu0 %v486
    %535 = vmatprep.subr.mxu0 0.0
    %536 = vmatpush1.msra.mxu0 %v485
    %537 = vmatprep.subr.mxu0 0.0
    %538 = vmatpush1.msra.mxu0 %v484
    %539 = vmatprep.subr.mxu0 0.0
    %540 = vmatpush2.msra.mxu0 0.0
    %541 = vmatprep.subr.mxu0 0.0
    %542 = vmatpush2.msra.mxu0 0.0
    %543 = vmatprep.subr.mxu0 0.0
    %544 = vmatpush2.msra.mxu0 0.0
    %545 = vmatprep.subr.mxu0 0.0
    %546 = vmatpush2.msra.mxu0 0.0
    %547 = vmatprep.subr.mxu0 0.0
    %548 = vmatpush2.msra.mxu0 0.0
    %549 = vmatprep.subr.mxu0 0.0
    %550 = vmatpush2.msra.mxu0 0.0
    %551 = vmatprep.subr.mxu0 0.0
    %552 = vmatpush2.msra.mxu0 0.0
    %553 = vmatprep.subr.mxu0 0.0
    %554 = vmatpush2.msra.mxu0 0.0
    %555 = vmatprep.subr.mxu0 0.0
    %556 = vmatpush2.msra.mxu0 0.0
    %557 = vmatprep.subr.mxu0 0.0
    %558 = vmatpush2.msra.mxu0 0.0
    %559 = vmatprep.subr.mxu0 0.0
    %560 = vmatpush2.msra.mxu0 0.0
    %561 = vmatprep.subr.mxu0 0.0
    %562 = vmatpush2.msra.mxu0 0.0
    %563 = vmatprep.subr.mxu0 0.0
    %564 = vmatpush2.msra.mxu0 0.0
    %565 = vmatprep.subr.mxu0 0.0
    %566 = vmatpush2.msra.mxu0 0.0
    %567 = vmatprep.subr.mxu0 0.0
    %568 = vmatpush2.msra.mxu0 0.0
    %569 = vmatprep.subr.mxu0 0.0
    %570 = vmatpush2.msra.mxu0 0.0
    %571 = vmatprep.mubr.f32.mxu0 0.0
    %572 = vmatmul.mubr.f32.gmra.mxu0 %v483
    %v573 = vpop.f32.mrf.mxu0
    %v574 = vadd.f32 %v505, %v573
    %v575 = vpop.f32.mrf.mxu0
    %576 = vdwg.mxu0
    %577 = vadd.xlane.f32.xlu0 %v574
    %v578 = vpop.xlane.xlu0 %577
    %v579 = vsub.f32 %v578, %v574
    %v580 = vmul.f32 %v579, 0.16666667
    %582 = vset.pattern.permute.xlu0 6
    %583 = vperm.xlu0 %582, %v580
    %v584 = vpop.permute.xlu0 %583
    %v586 = vsub.f32 %v574, %v584
    %588 = vset.pattern.permute.xlu0 6
    %589 = vperm.xlu0 %588, %v574
    %v590 = vpop.permute.xlu0 %589
    %v592 = vadd.f32 %v590, %v586
    %593 = vst [vmem:[#allocation8] sm:$0xff] %v592
    // Predicated region
    $region34: #{tpu_custom_call.1} parent=1 // pred_check
      _
    $region35: #{tpu_custom_call.1} parent=1 // pred_check_branch
      %595 = sbr.rel (0) target = $region37
    $region36: #{tpu_custom_call.1} parent=1 // pred_region
      %s597 = ssub.s32 128, 128
      %598 = vsyncadd [#allocation4], %s597
      %s600 = sshll.u32 [#allocation8], 4
      %s601 = int_to_ptr.vmem [resolvable:$true] %s600
      %603 = dma.vmem_to_hbm [thread:$0]  %s601, 128, %s5, [#allocation4]
    $region37: #{tpu_custom_call.1} parent=1 // pred_fallthru
      _
    // Predicated region
    $region38: #{tpu_custom_call.1} parent=1 // pred_check
      _
    $region39: #{tpu_custom_call.1} parent=1 // pred_check_branch
      %605 = sbr.rel (0) target = $region41
    $region40: #{tpu_custom_call.1} parent=1 // pred_region
      %606 = dma.done [#allocation4], 128
    $region41: #{tpu_custom_call.1} parent=1 // pred_fallthru
      _
    %607 = vsyncpa [#allocation3], 1
    %608 = vsyncpa [#allocation6], 1
    %609 = vsyncpa [#allocation4], 1

</llo_original>
